<compile_context>
chip_gen: v7x
topology: tpu7x:2x2x1
jax: 0.10.0
libtpu: 0.0.40
codegen_flags: <defaults>
</compile_context>

<pallas_src>
import jax
import jax.numpy as jnp
from jax.experimental import pallas as pl
from jax.experimental.pallas import tpu as pltpu


def _mean_kernel(x_ref, w_ref, b_ref, mean_ref):
    # mean_folded = x_folded @ blockdiag(W^T) + bias_folded
    acc = jnp.dot(x_ref[...], w_ref[...], preferred_element_type=jnp.float32)
    mean_ref[...] = (acc + b_ref[...]).astype(mean_ref.dtype)


def _pick_tile_rows(bf_rows, target_rows):
    """Pick the folded-row tile size.

    Tiny batches -> single full-extent block.  Otherwise cap at target_rows,
    keep a multiple of 16 (sublane rule, bf16-safe), and make sure the grid
    has at least 2 steps so v7x's two TensorCores both get work.
    """
    if bf_rows <= 32:
        return bf_rows
    tb = min(target_rows, pl.cdiv(bf_rows, 2))
    tb = max(16, (tb // 16) * 16)
    return tb


def diag_gaussian_forward(x, w_t, bias, logstd, *, fold=16, target_tile_rows=1024,
                          compute_dtype=jnp.float32):
    """Returns (action_mean, action_std) of the diagonal Gaussian.

    x      : (B, K) float32
    w_t    : (K, N) float32  -- fc_mean.weight transposed
    bias   : (N,)   float32  -- fc_mean.bias (zeros at init)
    logstd : (N,)   float32  -- AddBias parameter (zeros at init)

    action_mean : (B, N) float32
    action_std  : (N,)   float32   (batch-constant; callers broadcast lazily)
    """
    B, K = x.shape
    N = w_t.shape[1]

    # --- lane-fold preparation (wrapper-side layout plumbing, no extra compute) ---
    b_pad = ((B + fold - 1) // fold) * fold
    if b_pad != B:
        x = jnp.pad(x, ((0, b_pad - B), (0, 0)))
    bf_rows = b_pad // fold
    fk = fold * K           # folded contraction dim (lane-dense, multiple of 128)
    fn = fold * N           # folded output dim     (lane-dense, multiple of 128)

    x_f = x.reshape(bf_rows, fk).astype(compute_dtype)
    # Block-diagonal weight: kron(I_fold, W^T) -> (fold*K, fold*N).
    w_bd = jnp.kron(jnp.eye(fold, dtype=jnp.float32),
                    w_t.astype(jnp.float32)).astype(compute_dtype)
    bias_f = jnp.tile(bias.astype(jnp.float32), fold).reshape(1, fn)

    tb = _pick_tile_rows(bf_rows, target_tile_rows)
    grid = (pl.cdiv(bf_rows, tb),)

    itemsize = jnp.dtype(compute_dtype).itemsize
    cost = pl.CostEstimate(
        flops=2 * bf_rows * fk * fn,
        transcendentals=0,
        bytes_accessed=itemsize * (bf_rows * fk + fk * fn) + 4 * (fn + bf_rows * fn),
    )

    mean_f = pl.pallas_call(
        _mean_kernel,
        grid=grid,
        in_specs=[
            pl.BlockSpec((tb, fk), lambda i: (i, 0)),   # folded x : tiled over batch
            pl.BlockSpec((fk, fn), lambda i: (0, 0)),   # block-diag W^T : resident
            pl.BlockSpec((1, fn), lambda i: (0, 0)),    # folded bias    : resident
        ],
        out_specs=pl.BlockSpec((tb, fn), lambda i: (i, 0)),
        out_shape=jax.ShapeDtypeStruct((bf_rows, fn), jnp.float32),
        compiler_params=pltpu.CompilerParams(
            dimension_semantics=("parallel",),          # v7x: shard grid over 2 TCs
            vmem_limit_bytes=32 * 1024 * 1024,          # headroom on v5e, safe on v7x
        ),
        cost_estimate=cost,
    )(x_f, w_bd, bias_f)

    mean = mean_f.reshape(b_pad, N)[:B]

    # std = exp(logstd) is batch-independent: return it as (N,) and let callers
    # broadcast lazily -- no materialized (B, N) HBM writeback.
    std = jnp.exp(logstd.astype(jnp.float32))
    return mean, std


def _orthogonal(key, rows, cols, dtype=jnp.float32):
    """Orthogonal init matching nn.init.orthogonal_ semantics (gain=1)."""
    big, small = max(rows, cols), min(rows, cols)
    a = jax.random.normal(key, (big, small), dtype)
    q, r = jnp.linalg.qr(a)
    d = jnp.sign(jnp.diag(r))
    d = jnp.where(d == 0, jnp.ones_like(d), d)
    q = q * d
    if rows < cols:
        q = q.T
    return q[:rows, :cols]


if __name__ == "__main__":
    num_inputs, num_outputs = 32, 8

    key = jax.random.PRNGKey(0)
    kx, kw, kx2, kx3 = jax.random.split(key, 4)

    # Parameters as in __init__:
    #   fc_mean.weight : (num_outputs, num_inputs), orthogonal ; bias = 0
    #   logstd bias    : (num_outputs,) zeros
    w = _orthogonal(kw, num_outputs, num_inputs)          # torch layout (N, K)
    w_t = jnp.asarray(w.T, jnp.float32)                   # pass W^T: (K, N)
    bias = jnp.zeros((num_outputs,), jnp.float32)
    logstd = jnp.zeros((num_outputs,), jnp.float32)

    def ref(x):
        return x @ w_t + bias[None, :]

    # 1) Small batch, f32: single full-extent block (folded rows = 4).
    x1 = jax.random.normal(kx, (64, num_inputs), jnp.float32)
    mean1, std1 = diag_gaussian_forward(x1, w_t, bias, logstd)
    jax.block_until_ready((mean1, std1))
    assert mean1.shape == (64, num_outputs) and std1.shape == (num_outputs,)
    assert jnp.allclose(mean1, ref(x1), atol=1e-5), "mean mismatch (f32 small)"
    assert jnp.allclose(std1, jnp.exp(logstd), atol=1e-6), "std mismatch"

    # 2) Batch not a multiple of the fold factor: exercises the pad/slice path.
    x2 = jax.random.normal(kx2, (50, num_inputs), jnp.float32)
    mean2, _ = diag_gaussian_forward(x2, w_t, bias, logstd)
    jax.block_until_ready(mean2)
    assert mean2.shape == (50, num_outputs)
    assert jnp.allclose(mean2, ref(x2), atol=1e-5), "mean mismatch (pad path)"

    # 3) Larger batch, bf16 inputs + f32 accumulation: >=2 grid steps
    #    (folded rows = 64, tile rows = 32), halves the dominant x-read traffic.
    x3 = jax.random.normal(kx3, (1024, num_inputs), jnp.float32)
    mean3, _ = diag_gaussian_forward(x3, w_t, bias, logstd,
                                     compute_dtype=jnp.bfloat16)
    jax.block_until_ready(mean3)
    assert mean3.shape == (1024, num_outputs)
    assert jnp.allclose(mean3, ref(x3), atol=3e-2), "mean mismatch (bf16 path)"

    print("KERNEL_OK")
</pallas_src>

<mosaic_0001>
module attributes {stable_mosaic.version = 11 : i64} {
  func.func @_mean_kernel(%arg0: i32, %arg1: memref<4x512xf32, #tpu.memory_space<vmem>>, %arg2: memref<512x128xf32, #tpu.memory_space<vmem>>, %arg3: memref<1x128xf32, #tpu.memory_space<vmem>>, %arg4: memref<4x128xf32, #tpu.memory_space<vmem>>) attributes {dimension_semantics = [#tpu.dimension_semantics<parallel>], iteration_bounds = array<i64: 1>, scalar_prefetch = 0 : i64, scratch_operands = 0 : i64, tpu.core_type = #tpu.core_type<tc>, window_params = [{transform_indices = @transform_0, window_bounds = array<i64: 4, 512>}, {pipeline_mode = #tpu.pipeline_mode<synchronous>, transform_indices = @transform_1, window_bounds = array<i64: 512, 128>}, {pipeline_mode = #tpu.pipeline_mode<synchronous>, transform_indices = @transform_2, window_bounds = array<i64: 1, 128>}, {transform_indices = @transform_3, window_bounds = array<i64: 4, 128>}]} {
    %c0 = arith.constant 0 : index
    %c0_0 = arith.constant 0 : index
    %0 = vector.load %arg1[%c0, %c0_0] : memref<4x512xf32, #tpu.memory_space<vmem>>, vector<4x512xf32>
    %c0_1 = arith.constant 0 : index
    %c0_2 = arith.constant 0 : index
    %1 = vector.load %arg2[%c0_1, %c0_2] : memref<512x128xf32, #tpu.memory_space<vmem>>, vector<512x128xf32>
    %cst = arith.constant dense<0.000000e+00> : vector<4x128xf32>
    %2 = tpu.matmul %0, %1, %cst {dimension_numbers = #tpu.dot_dimension_numbers<[1], [0], [0], [1], [0, 0, 1, 1], [], []>} : vector<4x512xf32>, vector<512x128xf32>, vector<4x128xf32> -> vector<4x128xf32>
    %c0_3 = arith.constant 0 : index
    %c0_4 = arith.constant 0 : index
    %3 = vector.load %arg3[%c0_3, %c0_4] : memref<1x128xf32, #tpu.memory_space<vmem>>, vector<1x128xf32>
    %4 = vector.broadcast %3 : vector<1x128xf32> to vector<4x128xf32>
    %5 = arith.addf %2, %4 : vector<4x128xf32>
    %c0_5 = arith.constant 0 : index
    %c0_6 = arith.constant 0 : index
    %6 = vector.load %arg4[%c0_5, %c0_6] : memref<4x128xf32, #tpu.memory_space<vmem>>, vector<4x128xf32>
    tpu.vector_store %arg4[%c0_5, %c0_6], %5 {strides = array<i32>} : memref<4x128xf32, #tpu.memory_space<vmem>>, vector<4x128xf32>,
    return
  }
  func.func @transform_0(%arg0: i32) -> (i32, i32) {
    %c0_i32 = arith.constant 0 : i32
    %c0_i32_0 = arith.constant 0 : i32
    return %arg0, %c0_i32 : i32, i32
  }
  func.func @transform_1(%arg0: i32) -> (i32, i32) {
    %c0_i32 = arith.constant 0 : i32
    %c0_i32_0 = arith.constant 0 : i32
    %c0_i32_1 = arith.constant 0 : i32
    return %c0_i32, %c0_i32_0 : i32, i32
  }
  func.func @transform_2(%arg0: i32) -> (i32, i32) {
    %c0_i32 = arith.constant 0 : i32
    %c0_i32_0 = arith.constant 0 : i32
    %c0_i32_1 = arith.constant 0 : i32
    return %c0_i32, %c0_i32_0 : i32, i32
  }
  func.func @transform_3(%arg0: i32) -> (i32, i32) {
    %c0_i32 = arith.constant 0 : i32
    %c0_i32_0 = arith.constant 0 : i32
    return %arg0, %c0_i32 : i32, i32
  }
}

</mosaic_0001>

<llo_original>
// kernel: tpu_custom_call.1
$region0: #{tpu_custom_call.1}
  #allocation0 [shape = 'u32[]', space=smem, size = 0x4, offset = 0x4, fixed_abs, tag = 'smem constant byte address 0x4 - core index']
  #allocation1 [shape = 'u32[144,128]{1,0:T(1,128)}', space=vmem, size = 0x12000, scoped, tag = 'internal scratch']
  %s0 = inlined_call_operand.hbm [shape: f32[4,512], index: 0, kind: input, shape index: {}]
  %s1 = inlined_call_operand.hbm [shape: f32[512,128], index: 1, kind: input, shape index: {}]
  %s2 = inlined_call_operand.vmem [shape: f32[1,128], index: 2, kind: input, shape index: {}]
  %s3 = inlined_call_operand.hbm [shape: f32[4,128], index: 3, kind: output, shape index: {}]
  %s4 = sld [smem:[#allocation0]]
  $region30: #{tpu_custom_call.1} parent=0
    _
  %s6 = ssub.s32 1, %s4
  %s7 = scalar_select 0, %s6, %s4
  $region1: #{tpu_custom_call.1} parent=0
    #allocation2 [shape = 'u8[8192]{0}', space=vmem, size = 0x2000, scoped, tag = 'input window, operand 0, single buffered']
    #allocation3 [shape = 's32[1]{0}', space=sflag, size = 0x4, scoped, tag = 'scoped memory for tpu_custom_call.1']
    #allocation4 [shape = 's32[1]{0}', space=sflag, size = 0x4, scoped, tag = 'scoped memory for tpu_custom_call.1']
    #allocation5 [shape = 'u8[262144]{0}', space=vmem, size = 0x40000, scoped, tag = 'input window, operand 1, single buffered']
    #allocation6 [shape = 's32[1]{0}', space=sflag, size = 0x4, scoped, tag = 'scoped memory for tpu_custom_call.1']
    #allocation7 [shape = 'u8[2048]{0}', space=vmem, size = 0x800, scoped, tag = 'output window, operand 0, single buffered']
    %8 = vsyncpa [#allocation3], 0
    %9 = vsyncpa [#allocation6], 0
    %10 = vsyncpa [#allocation4], 0
    // Predicated region
    $region2: #{tpu_custom_call.1} parent=1 // pred_check
      _
    $region3: #{tpu_custom_call.1} parent=1 // pred_check_branch
      %12 = sbr.rel (0) target = $region5
    $region4: #{tpu_custom_call.1} parent=1 // pred_region
      %s14 = ssub.s32 256, 256
      %15 = vsyncadd [#allocation3], %s14
      %s17 = sshll.u32 [#allocation2], 4
      %s18 = int_to_ptr.vmem [resolvable:$true] %s17
      %20 = dma.hbm_to_vmem [thread:$0]  %s0, 256, %s18, [#allocation3]
    $region5: #{tpu_custom_call.1} parent=1 // pred_fallthru
      _
    // Predicated region
    $region6: #{tpu_custom_call.1} parent=1 // pred_check
      _
    $region7: #{tpu_custom_call.1} parent=1 // pred_check_branch
      %22 = sbr.rel (0) target = $region9
    $region8: #{tpu_custom_call.1} parent=1 // pred_region
      %s24 = ssub.s32 8192, 8192
      %25 = vsyncadd [#allocation6], %s24
      %s26 = sshll.u32 [#allocation5], 4
      %s27 = int_to_ptr.vmem [resolvable:$true] %s26
      %32 = dma.hbm_to_vmem [thread:$0]  %s1, 8192, %s27, [#allocation6], 128, 128, 8
    $region9: #{tpu_custom_call.1} parent=1 // pred_fallthru
      _
    // Predicated region
    $region10: #{tpu_custom_call.1} parent=1 // pred_check
      _
    $region11: #{tpu_custom_call.1} parent=1 // pred_check_branch
      %34 = sbr.rel (0) target = $region13
    $region12: #{tpu_custom_call.1} parent=1 // pred_region
      _
    $region13: #{tpu_custom_call.1} parent=1 // pred_fallthru
      _
    // Predicated region
    $region14: #{tpu_custom_call.1} parent=1 // pred_check
      _
    $region15: #{tpu_custom_call.1} parent=1 // pred_check_branch
      %36 = sbr.rel (0) target = $region17
    $region16: #{tpu_custom_call.1} parent=1 // pred_region
      %37 = dma.done [#allocation3], 256
    $region17: #{tpu_custom_call.1} parent=1 // pred_fallthru
      _
    // Predicated region
    $region18: #{tpu_custom_call.1} parent=1 // pred_check
      _
    $region19: #{tpu_custom_call.1} parent=1 // pred_check_branch
      %39 = sbr.rel (0) target = $region21
    $region20: #{tpu_custom_call.1} parent=1 // pred_region
      %40 = dma.done [#allocation6], 8192
    $region21: #{tpu_custom_call.1} parent=1 // pred_fallthru
      _
    %v41 = vld [vmem:[#allocation2] sm:$0xff]
    %v42 = vld [vmem:[#allocation2 + $0x8] sm:$0xff]
    %v43 = vld [vmem:[#allocation5] sm:$0xff]
    %v44 = vld [vmem:[#allocation5 + $0x8] sm:$0xff]
    %v45 = vld [vmem:[#allocation5 + $0x10] sm:$0xff]
    %v46 = vld [vmem:[#allocation5 + $0x18] sm:$0xff]
    %v47 = vld [vmem:[#allocation5 + $0x20] sm:$0xff]
    %v48 = vld [vmem:[#allocation5 + $0x28] sm:$0xff]
    %v49 = vld [vmem:[#allocation5 + $0x30] sm:$0xff]
    %v50 = vld [vmem:[#allocation5 + $0x38] sm:$0xff]
    %v51 = vld [vmem:[#allocation5 + $0x40] sm:$0xff]
    %v52 = vld [vmem:[#allocation5 + $0x48] sm:$0xff]
    %v53 = vld [vmem:[#allocation5 + $0x50] sm:$0xff]
    %v54 = vld [vmem:[#allocation5 + $0x58] sm:$0xff]
    %v55 = vld [vmem:[#allocation5 + $0x60] sm:$0xff]
    %v56 = vld [vmem:[#allocation5 + $0x68] sm:$0xff]
    %v57 = vld [vmem:[#allocation5 + $0x70] sm:$0xff]
    %v58 = vld [vmem:[#allocation5 + $0x78] sm:$0xff]
    %v59 = vld [vmem:[#allocation5 + $0x80] sm:$0xff]
    %v60 = vld [vmem:[#allocation5 + $0x88] sm:$0xff]
    %v61 = vld [vmem:[#allocation5 + $0x90] sm:$0xff]
    %v62 = vld [vmem:[#allocation5 + $0x98] sm:$0xff]
    %v63 = vld [vmem:[#allocation5 + $0xa0] sm:$0xff]
    %v64 = vld [vmem:[#allocation5 + $0xa8] sm:$0xff]
    %v65 = vld [vmem:[#allocation5 + $0xb0] sm:$0xff]
    %v66 = vld [vmem:[#allocation5 + $0xb8] sm:$0xff]
    %v67 = vld [vmem:[#allocation5 + $0xc0] sm:$0xff]
    %v68 = vld [vmem:[#allocation5 + $0xc8] sm:$0xff]
    %v69 = vld [vmem:[#allocation5 + $0xd0] sm:$0xff]
    %v70 = vld [vmem:[#allocation5 + $0xd8] sm:$0xff]
    %v71 = vld [vmem:[#allocation5 + $0xe0] sm:$0xff]
    %v72 = vld [vmem:[#allocation5 + $0xe8] sm:$0xff]
    %v73 = vld [vmem:[#allocation5 + $0xf0] sm:$0xff]
    %v74 = vld [vmem:[#allocation5 + $0xf8] sm:$0xff]
    %v75 = vld [vmem:[#allocation5 + $0x100] sm:$0xff]
    %v76 = vld [vmem:[#allocation5 + $0x108] sm:$0xff]
    %v77 = vld [vmem:[#allocation5 + $0x110] sm:$0xff]
    %v78 = vld [vmem:[#allocation5 + $0x118] sm:$0xff]
    %v79 = vld [vmem:[#allocation5 + $0x120] sm:$0xff]
    %v80 = vld [vmem:[#allocation5 + $0x128] sm:$0xff]
    %v81 = vld [vmem:[#allocation5 + $0x130] sm:$0xff]
    %v82 = vld [vmem:[#allocation5 + $0x138] sm:$0xff]
    %v83 = vld [vmem:[#allocation5 + $0x140] sm:$0xff]
    %v84 = vld [vmem:[#allocation5 + $0x148] sm:$0xff]
    %v85 = vld [vmem:[#allocation5 + $0x150] sm:$0xff]
    %v86 = vld [vmem:[#allocation5 + $0x158] sm:$0xff]
    %v87 = vld [vmem:[#allocation5 + $0x160] sm:$0xff]
    %v88 = vld [vmem:[#allocation5 + $0x168] sm:$0xff]
    %v89 = vld [vmem:[#allocation5 + $0x170] sm:$0xff]
    %v90 = vld [vmem:[#allocation5 + $0x178] sm:$0xff]
    %v91 = vld [vmem:[#allocation5 + $0x180] sm:$0xff]
    %v92 = vld [vmem:[#allocation5 + $0x188] sm:$0xff]
    %v93 = vld [vmem:[#allocation5 + $0x190] sm:$0xff]
    %v94 = vld [vmem:[#allocation5 + $0x198] sm:$0xff]
    %v95 = vld [vmem:[#allocation5 + $0x1a0] sm:$0xff]
    %v96 = vld [vmem:[#allocation5 + $0x1a8] sm:$0xff]
    %v97 = vld [vmem:[#allocation5 + $0x1b0] sm:$0xff]
    %v98 = vld [vmem:[#allocation5 + $0x1b8] sm:$0xff]
    %v99 = vld [vmem:[#allocation5 + $0x1c0] sm:$0xff]
    %v100 = vld [vmem:[#allocation5 + $0x1c8] sm:$0xff]
    %v101 = vld [vmem:[#allocation5 + $0x1d0] sm:$0xff]
    %v102 = vld [vmem:[#allocation5 + $0x1d8] sm:$0xff]
    %v103 = vld [vmem:[#allocation5 + $0x1e0] sm:$0xff]
    %v104 = vld [vmem:[#allocation5 + $0x1e8] sm:$0xff]
    %v105 = vld [vmem:[#allocation5 + $0x1f0] sm:$0xff]
    %v106 = vld [vmem:[#allocation5 + $0x1f8] sm:$0xff]
    %v107 = vld [vmem:[%s2] sm:$0x1]
    %v109 = vlaneseq
    %v110 = vshrl.u32 %v109, 7
    %v111 = vsub.s32 0, %v110
    %v112 = vrot.slane %v107, %v111
    %v116 = vcombine.high %v41, %v41
    %v117 = vcombine.high %v42, %v42
    %120 = vmatprep.subr.mxu0 0.0
    %121 = vmatpush1.msra.mxu0 %v43
    %122 = vmatprep.subr.mxu0 0.0
    %123 = vmatpush1.msra.mxu0 %v44
    %124 = vmatprep.subr.mxu0 0.0
    %125 = vmatpush1.msra.mxu0 %v45
    %126 = vmatprep.subr.mxu0 0.0
    %127 = vmatpush1.msra.mxu0 %v46
    %128 = vmatprep.subr.mxu0 0.0
    %129 = vmatpush1.msra.mxu0 %v47
    %130 = vmatprep.subr.mxu0 0.0
    %131 = vmatpush1.msra.mxu0 %v48
    %132 = vmatprep.subr.mxu0 0.0
    %133 = vmatpush1.msra.mxu0 %v49
    %134 = vmatprep.subr.mxu0 0.0
    %135 = vmatpush1.msra.mxu0 %v50
    %136 = vmatprep.subr.mxu0 0.0
    %137 = vmatpush1.msra.mxu0 %v51
    %138 = vmatprep.subr.mxu0 0.0
    %139 = vmatpush1.msra.mxu0 %v52
    %140 = vmatprep.subr.mxu0 0.0
    %141 = vmatpush1.msra.mxu0 %v53
    %142 = vmatprep.subr.mxu0 0.0
    %143 = vmatpush1.msra.mxu0 %v54
    %144 = vmatprep.subr.mxu0 0.0
    %145 = vmatpush1.msra.mxu0 %v55
    %146 = vmatprep.subr.mxu0 0.0
    %147 = vmatpush1.msra.mxu0 %v56
    %148 = vmatprep.subr.mxu0 0.0
    %149 = vmatpush1.msra.mxu0 %v57
    %150 = vmatprep.subr.mxu0 0.0
    %151 = vmatpush1.msra.mxu0 %v58
    %152 = vmatprep.subr.mxu0 0.0
    %153 = vmatpush1.msra.mxu0 %v59
    %154 = vmatprep.subr.mxu0 0.0
    %155 = vmatpush1.msra.mxu0 %v60
    %156 = vmatprep.subr.mxu0 0.0
    %157 = vmatpush1.msra.mxu0 %v61
    %158 = vmatprep.subr.mxu0 0.0
    %159 = vmatpush1.msra.mxu0 %v62
    %160 = vmatprep.subr.mxu0 0.0
    %161 = vmatpush1.msra.mxu0 %v63
    %162 = vmatprep.subr.mxu0 0.0
    %163 = vmatpush1.msra.mxu0 %v64
    %164 = vmatprep.subr.mxu0 0.0
    %165 = vmatpush1.msra.mxu0 %v65
    %166 = vmatprep.subr.mxu0 0.0
    %167 = vmatpush1.msra.mxu0 %v66
    %168 = vmatprep.subr.mxu0 0.0
    %169 = vmatpush1.msra.mxu0 %v67
    %170 = vmatprep.subr.mxu0 0.0
    %171 = vmatpush1.msra.mxu0 %v68
    %172 = vmatprep.subr.mxu0 0.0
    %173 = vmatpush1.msra.mxu0 %v69
    %174 = vmatprep.subr.mxu0 0.0
    %175 = vmatpush1.msra.mxu0 %v70
    %176 = vmatprep.subr.mxu0 0.0
    %177 = vmatpush1.msra.mxu0 %v71
    %178 = vmatprep.subr.mxu0 0.0
    %179 = vmatpush1.msra.mxu0 %v72
    %180 = vmatprep.subr.mxu0 0.0
    %181 = vmatpush1.msra.mxu0 %v73
    %182 = vmatprep.subr.mxu0 0.0
    %183 = vmatpush1.msra.mxu0 %v74
    %184 = vmatprep.mubr.f32.mxu0 %v116
    %185 = vmatmul.mubr.f32.gmra.mrb[0].mxu0 %v41
    %v186 = vpop.f32.mrb[0].mxu0
    %v187 = vadd.f32 %v112, %v186
    %v188 = vpop.f32.mrb[0].mxu0
    %189 = vdwg.mxu0
    %190 = vmatprep.subr.mxu0 0.0
    %191 = vmatpush1.msra.mxu0 %v75
    %192 = vmatprep.subr.mxu0 0.0
    %193 = vmatpush1.msra.mxu0 %v76
    %194 = vmatprep.subr.mxu0 0.0
    %195 = vmatpush1.msra.mxu0 %v77
    %196 = vmatprep.subr.mxu0 0.0
    %197 = vmatpush1.msra.mxu0 %v78
    %198 = vmatprep.subr.mxu0 0.0
    %199 = vmatpush1.msra.mxu0 %v79
    %200 = vmatprep.subr.mxu0 0.0
    %201 = vmatpush1.msra.mxu0 %v80
    %202 = vmatprep.subr.mxu0 0.0
    %203 = vmatpush1.msra.mxu0 %v81
    %204 = vmatprep.subr.mxu0 0.0
    %205 = vmatpush1.msra.mxu0 %v82
    %206 = vmatprep.subr.mxu0 0.0
    %207 = vmatpush1.msra.mxu0 %v83
    %208 = vmatprep.subr.mxu0 0.0
    %209 = vmatpush1.msra.mxu0 %v84
    %210 = vmatprep.subr.mxu0 0.0
    %211 = vmatpush1.msra.mxu0 %v85
    %212 = vmatprep.subr.mxu0 0.0
    %213 = vmatpush1.msra.mxu0 %v86
    %214 = vmatprep.subr.mxu0 0.0
    %215 = vmatpush1.msra.mxu0 %v87
    %216 = vmatprep.subr.mxu0 0.0
    %217 = vmatpush1.msra.mxu0 %v88
    %218 = vmatprep.subr.mxu0 0.0
    %219 = vmatpush1.msra.mxu0 %v89
    %220 = vmatprep.subr.mxu0 0.0
    %221 = vmatpush1.msra.mxu0 %v90
    %222 = vmatprep.subr.mxu0 0.0
    %223 = vmatpush1.msra.mxu0 %v91
    %224 = vmatprep.subr.mxu0 0.0
    %225 = vmatpush1.msra.mxu0 %v92
    %226 = vmatprep.subr.mxu0 0.0
    %227 = vmatpush1.msra.mxu0 %v93
    %228 = vmatprep.subr.mxu0 0.0
    %229 = vmatpush1.msra.mxu0 %v94
    %230 = vmatprep.subr.mxu0 0.0
    %231 = vmatpush1.msra.mxu0 %v95
    %232 = vmatprep.subr.mxu0 0.0
    %233 = vmatpush1.msra.mxu0 %v96
    %234 = vmatprep.subr.mxu0 0.0
    %235 = vmatpush1.msra.mxu0 %v97
    %236 = vmatprep.subr.mxu0 0.0
    %237 = vmatpush1.msra.mxu0 %v98
    %238 = vmatprep.subr.mxu0 0.0
    %239 = vmatpush1.msra.mxu0 %v99
    %240 = vmatprep.subr.mxu0 0.0
    %241 = vmatpush1.msra.mxu0 %v100
    %242 = vmatprep.subr.mxu0 0.0
    %243 = vmatpush1.msra.mxu0 %v101
    %244 = vmatprep.subr.mxu0 0.0
    %245 = vmatpush1.msra.mxu0 %v102
    %246 = vmatprep.subr.mxu0 0.0
    %247 = vmatpush1.msra.mxu0 %v103
    %248 = vmatprep.subr.mxu0 0.0
    %249 = vmatpush1.msra.mxu0 %v104
    %250 = vmatprep.subr.mxu0 0.0
    %251 = vmatpush1.msra.mxu0 %v105
    %252 = vmatprep.subr.mxu0 0.0
    %253 = vmatpush1.msra.mxu0 %v106
    %254 = vmatprep.mubr.f32.mxu0 %v117
    %255 = vmatmul.mubr.f32.gmra.mrb[0].mxu0 %v42
    %v256 = vpop.f32.mrb[0].mxu0
    %v257 = vadd.f32 %v187, %v256
    %v258 = vpop.f32.mrb[0].mxu0
    %259 = vdwg.mxu0
    %260 = vst [vmem:[#allocation7] sm:$0xf] %v257
    // Predicated region
    $region22: #{tpu_custom_call.1} parent=1 // pred_check
      _
    $region23: #{tpu_custom_call.1} parent=1 // pred_check_branch
      %262 = sbr.rel (0) target = $region25
    $region24: #{tpu_custom_call.1} parent=1 // pred_region
      %s264 = ssub.s32 64, 64
      %265 = vsyncadd [#allocation4], %s264
      %s267 = sshll.u32 [#allocation7], 4
      %s268 = int_to_ptr.vmem [resolvable:$true] %s267
      %270 = dma.vmem_to_hbm [thread:$0]  %s268, 64, %s3, [#allocation4]
    $region25: #{tpu_custom_call.1} parent=1 // pred_fallthru
      _
    // Predicated region
    $region26: #{tpu_custom_call.1} parent=1 // pred_check
      _
    $region27: #{tpu_custom_call.1} parent=1 // pred_check_branch
      %272 = sbr.rel (0) target = $region29
    $region28: #{tpu_custom_call.1} parent=1 // pred_region
      %273 = dma.done [#allocation4], 64
    $region29: #{tpu_custom_call.1} parent=1 // pred_fallthru
      _
    %274 = vsyncpa [#allocation3], 1
    %275 = vsyncpa [#allocation6], 1
    %276 = vsyncpa [#allocation4], 1

</llo_original>
